<compile_context>
chip_gen: v7x
topology: tpu7x:2x2x1
jax: 0.10.0
libtpu: 0.0.40
codegen_flags: <defaults>
</compile_context>

<pallas_src>
import jax
import jax.numpy as jnp
from jax.experimental import pallas as pl
from jax.experimental.pallas import tpu as pltpu


def grad_mlp_kernel(x_ref, w1t_ref, b1_ref, w1s_ref, o_ref):
    x = x_ref[...]          # (tb, D)
    w1t = w1t_ref[...]      # (D, H)   W1 pre-transposed (wrapper)
    b1 = b1_ref[...]        # (1, H)
    w1s = w1s_ref[...]      # (H, D)   W1 rows pre-scaled by w2 (wrapper)

    # forward: h = x @ W1^T + b1   (MXU, f32 accumulate)
    h = jnp.dot(x, w1t, preferred_element_type=jnp.float32) + b1
    t = jnp.tanh(h)                                   # (tb, H)  EUP
    g = 1.0 - t * t                                   # (tb, H)  VPU
    # backward through both Linears in one matmul: grad_x = g @ (diag(w2) @ W1)
    o_ref[...] = jnp.dot(g, w1s, preferred_element_type=jnp.float32).astype(o_ref.dtype)


def grad_mlp(x, w1, b1, w2, *, tile_b=512):
    """grad of sum(Linear(H,1)(tanh(Linear(D,H)(x)))) w.r.t. x.

    x:  (B, D) f32
    w1: (H, D) f32   PyTorch Linear(D->H).weight
    b1: (H,) or (1, H) f32
    w2: (1, H) f32   PyTorch Linear(H->1).weight
    """
    B, D = x.shape
    H = w1.shape[0]

    # Wrapper-side (one-time) parameter prep: transpose W1 and fold w2 into W1.
    w1t = jnp.transpose(w1)                 # (D, H)
    w1s = jnp.reshape(w2, (H, 1)) * w1      # (H, D) = diag(w2) @ W1
    b1 = jnp.reshape(b1, (1, H))

    # Effective batch tile: multiple of 8 sublanes, no bigger than padded B.
    tb = min(int(tile_b), ((B + 7) // 8) * 8)
    tb = max(8, ((tb + 7) // 8) * 8)
    n_tiles = pl.cdiv(B, tb)
    Bp = n_tiles * tb
    if Bp != B:
        x = jnp.pad(x, ((0, Bp - B), (0, 0)))

    out = pl.pallas_call(
        grad_mlp_kernel,
        out_shape=jax.ShapeDtypeStruct((Bp, D), jnp.float32),
        grid_spec=pltpu.PrefetchScalarGridSpec(
            num_scalar_prefetch=0,
            grid=(n_tiles,),
            in_specs=[
                pl.BlockSpec((tb, D), lambda i: (i, 0)),   # x tile
                pl.BlockSpec((D, H), lambda i: (0, 0)),    # W1^T   (resident)
                pl.BlockSpec((1, H), lambda i: (0, 0)),    # b1     (resident)
                pl.BlockSpec((H, D), lambda i: (0, 0)),    # diag(w2) @ W1 (resident)
            ],
            out_specs=pl.BlockSpec((tb, D), lambda i: (i, 0)),
        ),
        compiler_params=pltpu.CompilerParams(
            dimension_semantics=("parallel",),   # shards across TCs on v7x
        ),
    )(x, w1t, b1, w1s)

    return out[:B]


def grad_mlp_reference(x, w1, b1, w2, b2):
    # Pure-JAX reference via autodiff (mirrors torch.autograd.grad with ones).
    def net_sum(xx):
        h = xx @ w1.T + b1.reshape(1, -1)   # (B, H)
        a = jnp.tanh(h)
        y = a @ w2.T + b2                   # (B, 1)
        return jnp.sum(y)
    return jax.grad(net_sum)(x)


if __name__ == "__main__":
    B, D, H = 16, 32, 64
    key = jax.random.PRNGKey(0)
    kx, kw1, kb1, kw2, kb2, kx2 = jax.random.split(key, 6)

    x = jax.random.normal(kx, (B, D), dtype=jnp.float32)
    # Deterministic synthetic parameters (PyTorch nn.Linear shapes).
    w1 = jax.random.normal(kw1, (H, D), dtype=jnp.float32) * 0.1   # Linear(D->H).weight
    b1 = jax.random.normal(kb1, (1, H), dtype=jnp.float32) * 0.1   # Linear(D->H).bias
    w2 = jax.random.normal(kw2, (1, H), dtype=jnp.float32) * 0.1   # Linear(H->1).weight
    b2 = jax.random.normal(kb2, (1,), dtype=jnp.float32) * 0.1     # Linear(H->1).bias

    out = grad_mlp(x, w1, b1, w2)
    out = jax.block_until_ready(out)
    ref = grad_mlp_reference(x, w1, b1, w2, b2)
    assert out.shape == (B, D)
    assert jnp.allclose(out, ref, atol=1e-5, rtol=1e-5), "mismatch vs autodiff reference"

    # Second small check exercising padding + a multi-step grid.
    B2 = 40
    x2 = jax.random.normal(kx2, (B2, D), dtype=jnp.float32)
    out2 = jax.block_until_ready(grad_mlp(x2, w1, b1, w2, tile_b=16))
    ref2 = grad_mlp_reference(x2, w1, b1, w2, b2)
    assert out2.shape == (B2, D)
    assert jnp.allclose(out2, ref2, atol=1e-5, rtol=1e-5), "mismatch (padded / multi-tile)"

    print("KERNEL_OK")
</pallas_src>

<mosaic_0001>
module attributes {stable_mosaic.version = 11 : i64} {
  func.func @grad_mlp_kernel(%arg0: i32, %arg1: memref<16x32xf32, #tpu.memory_space<vmem>>, %arg2: memref<32x64xf32, #tpu.memory_space<vmem>>, %arg3: memref<1x64xf32, #tpu.memory_space<vmem>>, %arg4: memref<64x32xf32, #tpu.memory_space<vmem>>, %arg5: memref<16x32xf32, #tpu.memory_space<vmem>>) attributes {dimension_semantics = [#tpu.dimension_semantics<parallel>], iteration_bounds = array<i64: 1>, scalar_prefetch = 0 : i64, scratch_operands = 0 : i64, tpu.core_type = #tpu.core_type<tc>, window_params = [{transform_indices = @transform_0, window_bounds = array<i64: 16, 32>}, {pipeline_mode = #tpu.pipeline_mode<synchronous>, transform_indices = @transform_1, window_bounds = array<i64: 32, 64>}, {pipeline_mode = #tpu.pipeline_mode<synchronous>, transform_indices = @transform_2, window_bounds = array<i64: 1, 64>}, {pipeline_mode = #tpu.pipeline_mode<synchronous>, transform_indices = @transform_3, window_bounds = array<i64: 64, 32>}, {transform_indices = @transform_4, window_bounds = array<i64: 16, 32>}]} {
    %c0 = arith.constant 0 : index
    %c0_0 = arith.constant 0 : index
    %0 = vector.load %arg1[%c0, %c0_0] : memref<16x32xf32, #tpu.memory_space<vmem>>, vector<16x32xf32>
    %c0_1 = arith.constant 0 : index
    %c0_2 = arith.constant 0 : index
    %1 = vector.load %arg2[%c0_1, %c0_2] : memref<32x64xf32, #tpu.memory_space<vmem>>, vector<32x64xf32>
    %c0_3 = arith.constant 0 : index
    %c0_4 = arith.constant 0 : index
    %2 = vector.load %arg3[%c0_3, %c0_4] : memref<1x64xf32, #tpu.memory_space<vmem>>, vector<1x64xf32>
    %c0_5 = arith.constant 0 : index
    %c0_6 = arith.constant 0 : index
    %3 = vector.load %arg4[%c0_5, %c0_6] : memref<64x32xf32, #tpu.memory_space<vmem>>, vector<64x32xf32>
    %cst = arith.constant dense<0.000000e+00> : vector<16x64xf32>
    %4 = tpu.matmul %0, %1, %cst {dimension_numbers = #tpu.dot_dimension_numbers<[1], [0], [0], [1], [0, 0, 1, 1], [], []>} : vector<16x32xf32>, vector<32x64xf32>, vector<16x64xf32> -> vector<16x64xf32>
    %5 = vector.broadcast %2 : vector<1x64xf32> to vector<16x64xf32>
    %6 = arith.addf %4, %5 : vector<16x64xf32>
    %7 = math.tanh %6 : vector<16x64xf32>
    %8 = arith.mulf %7, %7 : vector<16x64xf32>
    %cst_7 = arith.constant 1.000000e+00 : f32
    %9 = vector.broadcast %cst_7 : f32 to vector<16x64xf32>
    %10 = arith.subf %9, %8 : vector<16x64xf32>
    %cst_8 = arith.constant dense<0.000000e+00> : vector<16x32xf32>
    %11 = tpu.matmul %10, %3, %cst_8 {dimension_numbers = #tpu.dot_dimension_numbers<[1], [0], [0], [1], [0, 0, 1, 1], [], []>} : vector<16x64xf32>, vector<64x32xf32>, vector<16x32xf32> -> vector<16x32xf32>
    %c0_9 = arith.constant 0 : index
    %c0_10 = arith.constant 0 : index
    %12 = vector.load %arg5[%c0_9, %c0_10] : memref<16x32xf32, #tpu.memory_space<vmem>>, vector<16x32xf32>
    tpu.vector_store %arg5[%c0_9, %c0_10], %11 {strides = array<i32>} : memref<16x32xf32, #tpu.memory_space<vmem>>, vector<16x32xf32>,
    return
  }
  func.func @transform_0(%arg0: i32) -> (i32, i32) {
    %c0_i32 = arith.constant 0 : i32
    %c0_i32_0 = arith.constant 0 : i32
    return %arg0, %c0_i32 : i32, i32
  }
  func.func @transform_1(%arg0: i32) -> (i32, i32) {
    %c0_i32 = arith.constant 0 : i32
    %c0_i32_0 = arith.constant 0 : i32
    %c0_i32_1 = arith.constant 0 : i32
    return %c0_i32, %c0_i32_0 : i32, i32
  }
  func.func @transform_2(%arg0: i32) -> (i32, i32) {
    %c0_i32 = arith.constant 0 : i32
    %c0_i32_0 = arith.constant 0 : i32
    %c0_i32_1 = arith.constant 0 : i32
    return %c0_i32, %c0_i32_0 : i32, i32
  }
  func.func @transform_3(%arg0: i32) -> (i32, i32) {
    %c0_i32 = arith.constant 0 : i32
    %c0_i32_0 = arith.constant 0 : i32
    %c0_i32_1 = arith.constant 0 : i32
    return %c0_i32, %c0_i32_0 : i32, i32
  }
  func.func @transform_4(%arg0: i32) -> (i32, i32) {
    %c0_i32 = arith.constant 0 : i32
    %c0_i32_0 = arith.constant 0 : i32
    return %arg0, %c0_i32 : i32, i32
  }
}

</mosaic_0001>

<llo_original>
// kernel: tpu_custom_call.1
$region0: #{tpu_custom_call.1}
  #allocation0 [shape = 'u32[]', space=smem, size = 0x4, offset = 0x4, fixed_abs, tag = 'smem constant byte address 0x4 - core index']
  #allocation1 [shape = 'u32[144,128]{1,0:T(1,128)}', space=vmem, size = 0x12000, scoped, tag = 'internal scratch']
  %s0 = inlined_call_operand.vmem [shape: f32[16,32], index: 0, kind: input, shape index: {}]
  %s1 = inlined_call_operand.vmem [shape: f32[32,64], index: 1, kind: input, shape index: {}]
  %s2 = inlined_call_operand.vmem [shape: f32[1,64], index: 2, kind: input, shape index: {}]
  %s3 = inlined_call_operand.vmem [shape: f32[64,32], index: 3, kind: input, shape index: {}]
  %s4 = inlined_call_operand.hbm [shape: f32[16,32], index: 4, kind: output, shape index: {}]
  %s5 = sld [smem:[#allocation0]]
  $region26: #{tpu_custom_call.1} parent=0
    _
  %s7 = ssub.s32 1, %s5
  %s8 = scalar_select 0, %s7, %s5
  $region1: #{tpu_custom_call.1} parent=0
    #allocation2 [shape = 'u8[8192]{0}', space=vmem, size = 0x2000, scoped, tag = 'output window, operand 0, single buffered']
    #allocation3 [shape = 's32[1]{0}', space=sflag, size = 0x4, scoped, tag = 'scoped memory for tpu_custom_call.1']
    %9 = vsyncpa [#allocation3], 0
    // Predicated region
    $region2: #{tpu_custom_call.1} parent=1 // pred_check
      _
    $region3: #{tpu_custom_call.1} parent=1 // pred_check_branch
      %11 = sbr.rel (0) target = $region5
    $region4: #{tpu_custom_call.1} parent=1 // pred_region
      _
    $region5: #{tpu_custom_call.1} parent=1 // pred_fallthru
      _
    // Predicated region
    $region6: #{tpu_custom_call.1} parent=1 // pred_check
      _
    $region7: #{tpu_custom_call.1} parent=1 // pred_check_branch
      %13 = sbr.rel (0) target = $region9
    $region8: #{tpu_custom_call.1} parent=1 // pred_region
      _
    $region9: #{tpu_custom_call.1} parent=1 // pred_fallthru
      _
    // Predicated region
    $region10: #{tpu_custom_call.1} parent=1 // pred_check
      _
    $region11: #{tpu_custom_call.1} parent=1 // pred_check_branch
      %15 = sbr.rel (0) target = $region13
    $region12: #{tpu_custom_call.1} parent=1 // pred_region
      _
    $region13: #{tpu_custom_call.1} parent=1 // pred_fallthru
      _
    // Predicated region
    $region14: #{tpu_custom_call.1} parent=1 // pred_check
      _
    $region15: #{tpu_custom_call.1} parent=1 // pred_check_branch
      %17 = sbr.rel (0) target = $region17
    $region16: #{tpu_custom_call.1} parent=1 // pred_region
      _
    $region17: #{tpu_custom_call.1} parent=1 // pred_fallthru
      _
    %v18 = vld [vmem:[%s0] sm:$0xff]
    %v19 = vld [vmem:[%s0 + $0x8] sm:$0xff]
    %v20 = vld [vmem:[%s1] sm:$0xff]
    %v21 = vld [vmem:[%s1 + $0x8] sm:$0xff]
    %v22 = vld [vmem:[%s1 + $0x10] sm:$0xff]
    %v23 = vld [vmem:[%s1 + $0x18] sm:$0xff]
    %v24 = vld [vmem:[%s2] sm:$0x1]
    %v25 = vld [vmem:[%s3] sm:$0xff]
    %v26 = vld [vmem:[%s3 + $0x8] sm:$0xff]
    %v27 = vld [vmem:[%s3 + $0x10] sm:$0xff]
    %v28 = vld [vmem:[%s3 + $0x18] sm:$0xff]
    %v29 = vld [vmem:[%s3 + $0x20] sm:$0xff]
    %v30 = vld [vmem:[%s3 + $0x28] sm:$0xff]
    %v31 = vld [vmem:[%s3 + $0x30] sm:$0xff]
    %v32 = vld [vmem:[%s3 + $0x38] sm:$0xff]
    %v34 = vlaneseq
    %v35 = vshrl.u32 %v34, 7
    %v36 = vsub.s32 0, %v35
    %v37 = vrot.slane %v24, %v36
    %vm39 = vcmask 261120
    %v41 = vsel %vm39, %v18, 0
    %v44 = vsel %vm39, %v19, 0
    %46 = vmatprep.subr.mxu0 0.0
    %47 = vmatpush1.msra.mxu0 %v20
    %48 = vmatprep.subr.mxu0 0.0
    %49 = vmatpush1.msra.mxu0 %v21
    %50 = vmatprep.subr.mxu0 0.0
    %51 = vmatpush1.msra.mxu0 %v22
    %52 = vmatprep.subr.mxu0 0.0
    %53 = vmatpush1.msra.mxu0 %v23
    %54 = vmatprep.subr.mxu0 0.0
    %55 = vmatpush1.msra.mxu0 0.0
    %56 = vmatprep.subr.mxu0 0.0
    %57 = vmatpush1.msra.mxu0 0.0
    %58 = vmatprep.subr.mxu0 0.0
    %59 = vmatpush1.msra.mxu0 0.0
    %60 = vmatprep.subr.mxu0 0.0
    %61 = vmatpush1.msra.mxu0 0.0
    %62 = vmatprep.subr.mxu0 0.0
    %63 = vmatpush1.msra.mxu0 0.0
    %64 = vmatprep.subr.mxu0 0.0
    %65 = vmatpush1.msra.mxu0 0.0
    %66 = vmatprep.subr.mxu0 0.0
    %67 = vmatpush1.msra.mxu0 0.0
    %68 = vmatprep.subr.mxu0 0.0
    %69 = vmatpush1.msra.mxu0 0.0
    %70 = vmatprep.subr.mxu0 0.0
    %71 = vmatpush1.msra.mxu0 0.0
    %72 = vmatprep.subr.mxu0 0.0
    %73 = vmatpush1.msra.mxu0 0.0
    %74 = vmatprep.subr.mxu0 0.0
    %75 = vmatpush1.msra.mxu0 0.0
    %76 = vmatprep.subr.mxu0 0.0
    %77 = vmatpush1.msra.mxu0 0.0
    %78 = vmatprep.subr.mxu0 0.0
    %79 = vmatpush1.msra.mxu0 0.0
    %80 = vmatprep.subr.mxu0 0.0
    %81 = vmatpush1.msra.mxu0 0.0
    %82 = vmatprep.subr.mxu0 0.0
    %83 = vmatpush1.msra.mxu0 0.0
    %84 = vmatprep.subr.mxu0 0.0
    %85 = vmatpush1.msra.mxu0 0.0
    %86 = vmatprep.subr.mxu0 0.0
    %87 = vmatpush1.msra.mxu0 0.0
    %88 = vmatprep.subr.mxu0 0.0
    %89 = vmatpush1.msra.mxu0 0.0
    %90 = vmatprep.subr.mxu0 0.0
    %91 = vmatpush1.msra.mxu0 0.0
    %92 = vmatprep.subr.mxu0 0.0
    %93 = vmatpush1.msra.mxu0 0.0
    %94 = vmatprep.subr.mxu0 0.0
    %95 = vmatpush1.msra.mxu0 0.0
    %96 = vmatprep.subr.mxu0 0.0
    %97 = vmatpush1.msra.mxu0 0.0
    %98 = vmatprep.subr.mxu0 0.0
    %99 = vmatpush1.msra.mxu0 0.0
    %100 = vmatprep.subr.mxu0 0.0
    %101 = vmatpush1.msra.mxu0 0.0
    %102 = vmatprep.subr.mxu0 0.0
    %103 = vmatpush1.msra.mxu0 0.0
    %104 = vmatprep.subr.mxu0 0.0
    %105 = vmatpush1.msra.mxu0 0.0
    %106 = vmatprep.subr.mxu0 0.0
    %107 = vmatpush1.msra.mxu0 0.0
    %108 = vmatprep.subr.mxu0 0.0
    %109 = vmatpush1.msra.mxu0 0.0
    %110 = vmatprep.mubr.f32.mxu0 0.0
    %111 = vmatmul.mubr.f32.gmra.mrb[0].mxu0 %v41
    %v112 = vpop.f32.mrb[0].mxu0
    %v113 = vadd.f32 %v37, %v112
    %v114 = vpop.f32.mrb[0].mxu0
    %115 = vmatprep.mubr.f32.mxu0 0.0
    %116 = vmatmul.mubr.f32.gmra.mrb[0].mxu0 %v44
    %v117 = vpop.f32.mrb[0].mxu0
    %v118 = vadd.f32 %v37, %v117
    %v119 = vpop.f32.mrb[0].mxu0
    %120 = vdwg.mxu0
    %v121 = vtanh.pop %v113
    %v122 = vtanh.pop %v118
    %v123 = vmul.f32 %v121, %v121
    %v124 = vmul.f32 %v122, %v122
    %v125 = vsub.f32 1.0, %v123
    %v126 = vsub.f32 1.0, %v124
    %vm127 = vcmask 523264
    %v129 = vsel %vm127, %v125, 0
    %v132 = vsel %vm127, %v126, 0
    %134 = vmatprep.subr.mxu0 0.0
    %135 = vmatpush1.msra.mxu0 %v25
    %136 = vmatprep.subr.mxu0 0.0
    %137 = vmatpush1.msra.mxu0 %v26
    %138 = vmatprep.subr.mxu0 0.0
    %139 = vmatpush1.msra.mxu0 %v27
    %140 = vmatprep.subr.mxu0 0.0
    %141 = vmatpush1.msra.mxu0 %v28
    %142 = vmatprep.subr.mxu0 0.0
    %143 = vmatpush1.msra.mxu0 %v29
    %144 = vmatprep.subr.mxu0 0.0
    %145 = vmatpush1.msra.mxu0 %v30
    %146 = vmatprep.subr.mxu0 0.0
    %147 = vmatpush1.msra.mxu0 %v31
    %148 = vmatprep.subr.mxu0 0.0
    %149 = vmatpush1.msra.mxu0 %v32
    %150 = vmatprep.subr.mxu0 0.0
    %151 = vmatpush1.msra.mxu0 0.0
    %152 = vmatprep.subr.mxu0 0.0
    %153 = vmatpush1.msra.mxu0 0.0
    %154 = vmatprep.subr.mxu0 0.0
    %155 = vmatpush1.msra.mxu0 0.0
    %156 = vmatprep.subr.mxu0 0.0
    %157 = vmatpush1.msra.mxu0 0.0
    %158 = vmatprep.subr.mxu0 0.0
    %159 = vmatpush1.msra.mxu0 0.0
    %160 = vmatprep.subr.mxu0 0.0
    %161 = vmatpush1.msra.mxu0 0.0
    %162 = vmatprep.subr.mxu0 0.0
    %163 = vmatpush1.msra.mxu0 0.0
    %164 = vmatprep.subr.mxu0 0.0
    %165 = vmatpush1.msra.mxu0 0.0
    %166 = vmatprep.subr.mxu0 0.0
    %167 = vmatpush1.msra.mxu0 0.0
    %168 = vmatprep.subr.mxu0 0.0
    %169 = vmatpush1.msra.mxu0 0.0
    %170 = vmatprep.subr.mxu0 0.0
    %171 = vmatpush1.msra.mxu0 0.0
    %172 = vmatprep.subr.mxu0 0.0
    %173 = vmatpush1.msra.mxu0 0.0
    %174 = vmatprep.subr.mxu0 0.0
    %175 = vmatpush1.msra.mxu0 0.0
    %176 = vmatprep.subr.mxu0 0.0
    %177 = vmatpush1.msra.mxu0 0.0
    %178 = vmatprep.subr.mxu0 0.0
    %179 = vmatpush1.msra.mxu0 0.0
    %180 = vmatprep.subr.mxu0 0.0
    %181 = vmatpush1.msra.mxu0 0.0
    %182 = vmatprep.subr.mxu0 0.0
    %183 = vmatpush1.msra.mxu0 0.0
    %184 = vmatprep.subr.mxu0 0.0
    %185 = vmatpush1.msra.mxu0 0.0
    %186 = vmatprep.subr.mxu0 0.0
    %187 = vmatpush1.msra.mxu0 0.0
    %188 = vmatprep.subr.mxu0 0.0
    %189 = vmatpush1.msra.mxu0 0.0
    %190 = vmatprep.subr.mxu0 0.0
    %191 = vmatpush1.msra.mxu0 0.0
    %192 = vmatprep.subr.mxu0 0.0
    %193 = vmatpush1.msra.mxu0 0.0
    %194 = vmatprep.subr.mxu0 0.0
    %195 = vmatpush1.msra.mxu0 0.0
    %196 = vmatprep.subr.mxu0 0.0
    %197 = vmatpush1.msra.mxu0 0.0
    %198 = vmatprep.mubr.f32.mxu0 0.0
    %199 = vmatmul.mubr.f32.gmra.mrb[0].mxu0 %v129
    %v200 = vpop.f32.mrb[0].mxu0
    %v201 = vadd.f32 0.0, %v200
    %v202 = vpop.f32.mrb[0].mxu0
    %203 = vmatprep.mubr.f32.mxu0 0.0
    %204 = vmatmul.mubr.f32.gmra.mrb[0].mxu0 %v132
    %v205 = vpop.f32.mrb[0].mxu0
    %v206 = vadd.f32 0.0, %v205
    %v207 = vpop.f32.mrb[0].mxu0
    %208 = vdwg.mxu0
    %209 = vst.msk [vmem:[#allocation2] sm:$0xff] %vm39, %v201
    %210 = vst.msk [vmem:[#allocation2 + $0x8] sm:$0xff] %vm39, %v206
    // Predicated region
    $region18: #{tpu_custom_call.1} parent=1 // pred_check
      _
    $region19: #{tpu_custom_call.1} parent=1 // pred_check_branch
      %212 = sbr.rel (0) target = $region21
    $region20: #{tpu_custom_call.1} parent=1 // pred_region
      %s214 = ssub.s32 256, 256
      %215 = vsyncadd [#allocation3], %s214
      %s216 = sshll.u32 [#allocation2], 4
      %s217 = int_to_ptr.vmem [resolvable:$true] %s216
      %222 = dma.vmem_to_hbm [thread:$0]  %s217, 256, %s4, [#allocation3], 128, 128, 8
    $region21: #{tpu_custom_call.1} parent=1 // pred_fallthru
      _
    // Predicated region
    $region22: #{tpu_custom_call.1} parent=1 // pred_check
      _
    $region23: #{tpu_custom_call.1} parent=1 // pred_check_branch
      %224 = sbr.rel (0) target = $region25
    $region24: #{tpu_custom_call.1} parent=1 // pred_region
      %225 = dma.done [#allocation3], 256
    $region25: #{tpu_custom_call.1} parent=1 // pred_fallthru
      _
    %226 = vsyncpa [#allocation3], 1

</llo_original>
